<compile_context>
chip_gen: v6e
topology: v6e:2x2x1
jax: 0.10.0
libtpu: 0.0.40
codegen_flags: <defaults>
</compile_context>

<pallas_src>
import functools

import jax
import jax.numpy as jnp
from jax.experimental import pallas as pl
from jax.experimental.pallas import tpu as pltpu


def enhancement_module_forward(image, parameters):
    """Base-class EnhancementModule.forward(image, parameters) -> image.

    Pure pass-through: an identity does not warrant a kernel (it would burn
    2x image bytes of HBM bandwidth for zero compute).
    """
    del parameters
    return image


def _piecewise_kernel(img_ref, w_ref, out_ref, *, num_nodes):
    """One (1, TH, TW) tile of: x + hat-basis(x) . w[row].

    Exact reformulation of sum_f relu(1-|sx-f|)*w[f]: only the two nodes
    bracketing k = clamp(floor(sx), 0, D-2) can be non-zero, and evaluating
    their hats directly reproduces the original sum everywhere (including
    x < 0 and x > 1, where the hats decay to zero).
    """
    r = pl.program_id(0)
    base = r * num_nodes                               # scalar offset into SMEM weights

    x = img_ref[0].astype(jnp.float32)                 # (TH, TW)
    sx = jnp.float32(num_nodes - 1) * x
    k = jnp.clip(jnp.floor(sx), 0.0, jnp.float32(num_nodes - 2))
    frac = sx - k                                      # exact (Sterbenz) for in-range x

    # Select-chain gather of the two bracketing weights; scalar SMEM operands
    # splat for free in the VPU selects.
    w_lo = w_ref[base + 0]
    w_hi = w_ref[base + 1]
    for f in range(1, num_nodes - 1):
        m = k == jnp.float32(f)
        w_lo = jnp.where(m, w_ref[base + f], w_lo)
        w_hi = jnp.where(m, w_ref[base + f + 1], w_hi)

    d_lo = jnp.maximum(1.0 - jnp.abs(frac), 0.0)        # == relu(1-|sx-k|)
    d_hi = jnp.maximum(1.0 - jnp.abs(frac - 1.0), 0.0)  # == relu(1-|sx-(k+1)|)
    out = x + d_lo * w_lo + d_hi * w_hi
    out_ref[0] = out.astype(out_ref.dtype)


def _tile_hw(h, w, itemsize, budget_bytes=2 * 1024 * 1024):
    """Pick (TH, TW) for a (rows, H, W) slab from a byte budget.

    Each dim is either a hardware-aligned tile (mult of 8 / 128, partial last
    block handled by Pallas masking) or the full extent (always legal).
    """
    max_lanes = max(128, (budget_bytes // itemsize) // 128 * 128)
    if w <= max_lanes or w < 128:
        tw = w                                  # full extent
    else:
        tw = max_lanes                          # multiple of 128; cdiv grid, masked tail
    rows_budget = max(1, budget_bytes // (tw * itemsize))
    if rows_budget >= h or h <= 8:
        th = h                                  # full extent
    else:
        th = max(8, (rows_budget // 8) * 8)     # multiple of 8; cdiv grid, masked tail
    return th, tw


def piecewise_enhance(applyto, parameters, num_nodes):
    """result = applyto + PiecewiseBasis(num_nodes)(applyto, parameters).

    applyto:    (B, 3, H, W)
    parameters: (B, 3 * num_nodes)  -- output of the (untranslated) backbone.
    """
    b, c, h, w = applyto.shape
    rows = b * c
    itemsize = jnp.dtype(applyto.dtype).itemsize

    img3d = applyto.reshape(rows, h, w)                     # no padding, no copies
    w1d = parameters.reshape(-1).astype(jnp.float32)        # (rows * D,) SMEM scalars

    th, tw = _tile_hw(h, w, itemsize)
    grid = (rows, pl.cdiv(h, th), pl.cdiv(w, tw))

    flops = rows * h * w * (3 * num_nodes + 10)
    bytes_accessed = 2 * rows * h * w * itemsize + w1d.size * 4

    out3d = pl.pallas_call(
        functools.partial(_piecewise_kernel, num_nodes=num_nodes),
        out_shape=jax.ShapeDtypeStruct((rows, h, w), applyto.dtype),
        grid=grid,
        in_specs=[
            pl.BlockSpec((1, th, tw), lambda r, i, j: (r, i, j)),    # image tile
            pl.BlockSpec(memory_space=pltpu.MemorySpace.SMEM),       # all weights, SMEM
        ],
        out_specs=pl.BlockSpec((1, th, tw), lambda r, i, j: (r, i, j)),
        # Reuse the image buffer for the output when the caller donates it.
        input_output_aliases={0: 0},
        compiler_params=pltpu.CompilerParams(
            dimension_semantics=("parallel", "parallel", "parallel")),
        cost_estimate=pl.CostEstimate(
            flops=flops, transcendentals=0, bytes_accessed=bytes_accessed),
    )(img3d, w1d)

    return out3d.reshape(b, c, h, w)


def piecewise_reference(applyto, parameters, num_nodes):
    """Pure-JAX reference of PiecewiseBasis.forward + residual add."""
    b, c, h, w = applyto.shape
    nodes = jnp.arange(num_nodes, dtype=jnp.float32).reshape(1, 1, num_nodes, 1, 1)
    x = applyto[:, :, None, :, :].astype(jnp.float32)
    basis = jax.nn.relu(1.0 - jnp.abs((num_nodes - 1) * x - nodes))
    wts = parameters.reshape(b, c, num_nodes).astype(jnp.float32)
    enhanced = jnp.einsum('bcfij,bcf->bcij', basis, wts)
    return (applyto + enhanced).astype(applyto.dtype)


if __name__ == "__main__":
    key = jax.random.PRNGKey(0)
    k_img, k_par = jax.random.split(key)

    batch, channels, height, width = 2, 3, 16, 16   # PiecewiseBasis is 3-channel
    num_nodes = 10                                  # Piecewise_MNv3 default

    image = jax.random.uniform(
        k_img, (batch, channels, height, width), dtype=jnp.float32)
    # Stand-in for the backbone's fc output (parameters_count = 3 * num_nodes).
    parameters = 0.1 * jax.random.normal(
        k_par, (batch, channels * num_nodes), dtype=jnp.float32)

    # Identity path of the base EnhancementModule (no kernel).
    assert enhancement_module_forward(image, parameters) is image

    expected = piecewise_reference(image, parameters, num_nodes)
    out = piecewise_enhance(image, parameters, num_nodes)
    out = jax.block_until_ready(out)

    assert out.shape == image.shape
    assert out.dtype == image.dtype
    assert jnp.allclose(out, expected, atol=1e-5, rtol=1e-5)
    print("KERNEL_OK")
</pallas_src>

<mosaic_0001>
module attributes {stable_mosaic.version = 11 : i64} {
  func.func @_piecewise_kernel(%arg0: i32, %arg1: i32, %arg2: i32, %arg3: memref<1x16x16xf32, #tpu.memory_space<vmem>>, %arg4: memref<60xf32, #tpu.memory_space<smem>>, %arg5: memref<1x16x16xf32, #tpu.memory_space<vmem>>) attributes {dimension_semantics = [#tpu.dimension_semantics<parallel>, #tpu.dimension_semantics<parallel>, #tpu.dimension_semantics<parallel>], iteration_bounds = array<i64: 6, 1, 1>, scalar_prefetch = 0 : i64, scratch_operands = 0 : i64, tpu.core_type = #tpu.core_type<tc>, window_params = [{transform_indices = @transform_0, window_bounds = array<i64: 1, 16, 16>}, {transform_indices = @transform_1, window_bounds = array<i64: 60>}, {transform_indices = @transform_2, window_bounds = array<i64: 1, 16, 16>}]} {
    %c10_i32 = arith.constant 10 : i32
    %0 = arith.muli %arg0, %c10_i32 : i32
    %c0 = arith.constant 0 : index
    %c0_0 = arith.constant 0 : index
    %c0_1 = arith.constant 0 : index
    %1 = vector.load %arg3[%c0, %c0_0, %c0_1] : memref<1x16x16xf32, #tpu.memory_space<vmem>>, vector<1x16x16xf32>
    %2 = vector.shape_cast %1 : vector<1x16x16xf32> to vector<16x16xf32>
    %cst = arith.constant 9.000000e+00 : f32
    %3 = vector.broadcast %cst : f32 to vector<16x16xf32>
    %4 = arith.mulf %3, %2 : vector<16x16xf32>
    %5 = math.floor %4 : vector<16x16xf32>
    %cst_2 = arith.constant 0.000000e+00 : f32
    %cst_3 = arith.constant 8.000000e+00 : f32
    %6 = vector.broadcast %cst_2 : f32 to vector<16x16xf32>
    %7 = arith.maximumf %6, %5 : vector<16x16xf32>
    %8 = vector.broadcast %cst_3 : f32 to vector<16x16xf32>
    %9 = arith.minimumf %8, %7 : vector<16x16xf32>
    %10 = arith.subf %4, %9 : vector<16x16xf32>
    %c0_i32 = arith.constant 0 : i32
    %11 = arith.addi %0, %c0_i32 : i32
    %12 = arith.index_cast %11 : i32 to index
    %13 = memref.load %arg4[%12] : memref<60xf32, #tpu.memory_space<smem>>
    %c1_i32 = arith.constant 1 : i32
    %14 = arith.addi %0, %c1_i32 : i32
    %15 = arith.index_cast %14 : i32 to index
    %16 = memref.load %arg4[%15] : memref<60xf32, #tpu.memory_space<smem>>
    %cst_4 = arith.constant 1.000000e+00 : f32
    %17 = vector.broadcast %cst_4 : f32 to vector<16x16xf32>
    %18 = arith.cmpf oeq, %9, %17 : vector<16x16xf32>
    %c1_i32_5 = arith.constant 1 : i32
    %19 = arith.addi %0, %c1_i32_5 : i32
    %20 = arith.index_cast %19 : i32 to index
    %21 = memref.load %arg4[%20] : memref<60xf32, #tpu.memory_space<smem>>
    %22 = vector.broadcast %21 : f32 to vector<16x16xf32>
    %23 = vector.broadcast %13 : f32 to vector<16x16xf32>
    %24 = arith.select %18, %22, %23 : vector<16x16xi1>, vector<16x16xf32>
    %c1_i32_6 = arith.constant 1 : i32
    %25 = arith.addi %0, %c1_i32_6 : i32
    %c1_i32_7 = arith.constant 1 : i32
    %26 = arith.addi %25, %c1_i32_7 : i32
    %27 = arith.index_cast %26 : i32 to index
    %28 = memref.load %arg4[%27] : memref<60xf32, #tpu.memory_space<smem>>
    %29 = vector.broadcast %28 : f32 to vector<16x16xf32>
    %30 = vector.broadcast %16 : f32 to vector<16x16xf32>
    %31 = arith.select %18, %29, %30 : vector<16x16xi1>, vector<16x16xf32>
    %cst_8 = arith.constant 2.000000e+00 : f32
    %32 = vector.broadcast %cst_8 : f32 to vector<16x16xf32>
    %33 = arith.cmpf oeq, %9, %32 : vector<16x16xf32>
    %c2_i32 = arith.constant 2 : i32
    %34 = arith.addi %0, %c2_i32 : i32
    %35 = arith.index_cast %34 : i32 to index
    %36 = memref.load %arg4[%35] : memref<60xf32, #tpu.memory_space<smem>>
    %37 = vector.broadcast %36 : f32 to vector<16x16xf32>
    %38 = arith.select %33, %37, %24 : vector<16x16xi1>, vector<16x16xf32>
    %c2_i32_9 = arith.constant 2 : i32
    %39 = arith.addi %0, %c2_i32_9 : i32
    %c1_i32_10 = arith.constant 1 : i32
    %40 = arith.addi %39, %c1_i32_10 : i32
    %41 = arith.index_cast %40 : i32 to index
    %42 = memref.load %arg4[%41] : memref<60xf32, #tpu.memory_space<smem>>
    %43 = vector.broadcast %42 : f32 to vector<16x16xf32>
    %44 = arith.select %33, %43, %31 : vector<16x16xi1>, vector<16x16xf32>
    %cst_11 = arith.constant 3.000000e+00 : f32
    %45 = vector.broadcast %cst_11 : f32 to vector<16x16xf32>
    %46 = arith.cmpf oeq, %9, %45 : vector<16x16xf32>
    %c3_i32 = arith.constant 3 : i32
    %47 = arith.addi %0, %c3_i32 : i32
    %48 = arith.index_cast %47 : i32 to index
    %49 = memref.load %arg4[%48] : memref<60xf32, #tpu.memory_space<smem>>
    %50 = vector.broadcast %49 : f32 to vector<16x16xf32>
    %51 = arith.select %46, %50, %38 : vector<16x16xi1>, vector<16x16xf32>
    %c3_i32_12 = arith.constant 3 : i32
    %52 = arith.addi %0, %c3_i32_12 : i32
    %c1_i32_13 = arith.constant 1 : i32
    %53 = arith.addi %52, %c1_i32_13 : i32
    %54 = arith.index_cast %53 : i32 to index
    %55 = memref.load %arg4[%54] : memref<60xf32, #tpu.memory_space<smem>>
    %56 = vector.broadcast %55 : f32 to vector<16x16xf32>
    %57 = arith.select %46, %56, %44 : vector<16x16xi1>, vector<16x16xf32>
    %cst_14 = arith.constant 4.000000e+00 : f32
    %58 = vector.broadcast %cst_14 : f32 to vector<16x16xf32>
    %59 = arith.cmpf oeq, %9, %58 : vector<16x16xf32>
    %c4_i32 = arith.constant 4 : i32
    %60 = arith.addi %0, %c4_i32 : i32
    %61 = arith.index_cast %60 : i32 to index
    %62 = memref.load %arg4[%61] : memref<60xf32, #tpu.memory_space<smem>>
    %63 = vector.broadcast %62 : f32 to vector<16x16xf32>
    %64 = arith.select %59, %63, %51 : vector<16x16xi1>, vector<16x16xf32>
    %c4_i32_15 = arith.constant 4 : i32
    %65 = arith.addi %0, %c4_i32_15 : i32
    %c1_i32_16 = arith.constant 1 : i32
    %66 = arith.addi %65, %c1_i32_16 : i32
    %67 = arith.index_cast %66 : i32 to index
    %68 = memref.load %arg4[%67] : memref<60xf32, #tpu.memory_space<smem>>
    %69 = vector.broadcast %68 : f32 to vector<16x16xf32>
    %70 = arith.select %59, %69, %57 : vector<16x16xi1>, vector<16x16xf32>
    %cst_17 = arith.constant 5.000000e+00 : f32
    %71 = vector.broadcast %cst_17 : f32 to vector<16x16xf32>
    %72 = arith.cmpf oeq, %9, %71 : vector<16x16xf32>
    %c5_i32 = arith.constant 5 : i32
    %73 = arith.addi %0, %c5_i32 : i32
    %74 = arith.index_cast %73 : i32 to index
    %75 = memref.load %arg4[%74] : memref<60xf32, #tpu.memory_space<smem>>
    %76 = vector.broadcast %75 : f32 to vector<16x16xf32>
    %77 = arith.select %72, %76, %64 : vector<16x16xi1>, vector<16x16xf32>
    %c5_i32_18 = arith.constant 5 : i32
    %78 = arith.addi %0, %c5_i32_18 : i32
    %c1_i32_19 = arith.constant 1 : i32
    %79 = arith.addi %78, %c1_i32_19 : i32
    %80 = arith.index_cast %79 : i32 to index
    %81 = memref.load %arg4[%80] : memref<60xf32, #tpu.memory_space<smem>>
    %82 = vector.broadcast %81 : f32 to vector<16x16xf32>
    %83 = arith.select %72, %82, %70 : vector<16x16xi1>, vector<16x16xf32>
    %cst_20 = arith.constant 6.000000e+00 : f32
    %84 = vector.broadcast %cst_20 : f32 to vector<16x16xf32>
    %85 = arith.cmpf oeq, %9, %84 : vector<16x16xf32>
    %c6_i32 = arith.constant 6 : i32
    %86 = arith.addi %0, %c6_i32 : i32
    %87 = arith.index_cast %86 : i32 to index
    %88 = memref.load %arg4[%87] : memref<60xf32, #tpu.memory_space<smem>>
    %89 = vector.broadcast %88 : f32 to vector<16x16xf32>
    %90 = arith.select %85, %89, %77 : vector<16x16xi1>, vector<16x16xf32>
    %c6_i32_21 = arith.constant 6 : i32
    %91 = arith.addi %0, %c6_i32_21 : i32
    %c1_i32_22 = arith.constant 1 : i32
    %92 = arith.addi %91, %c1_i32_22 : i32
    %93 = arith.index_cast %92 : i32 to index
    %94 = memref.load %arg4[%93] : memref<60xf32, #tpu.memory_space<smem>>
    %95 = vector.broadcast %94 : f32 to vector<16x16xf32>
    %96 = arith.select %85, %95, %83 : vector<16x16xi1>, vector<16x16xf32>
    %cst_23 = arith.constant 7.000000e+00 : f32
    %97 = vector.broadcast %cst_23 : f32 to vector<16x16xf32>
    %98 = arith.cmpf oeq, %9, %97 : vector<16x16xf32>
    %c7_i32 = arith.constant 7 : i32
    %99 = arith.addi %0, %c7_i32 : i32
    %100 = arith.index_cast %99 : i32 to index
    %101 = memref.load %arg4[%100] : memref<60xf32, #tpu.memory_space<smem>>
    %102 = vector.broadcast %101 : f32 to vector<16x16xf32>
    %103 = arith.select %98, %102, %90 : vector<16x16xi1>, vector<16x16xf32>
    %c7_i32_24 = arith.constant 7 : i32
    %104 = arith.addi %0, %c7_i32_24 : i32
    %c1_i32_25 = arith.constant 1 : i32
    %105 = arith.addi %104, %c1_i32_25 : i32
    %106 = arith.index_cast %105 : i32 to index
    %107 = memref.load %arg4[%106] : memref<60xf32, #tpu.memory_space<smem>>
    %108 = vector.broadcast %107 : f32 to vector<16x16xf32>
    %109 = arith.select %98, %108, %96 : vector<16x16xi1>, vector<16x16xf32>
    %cst_26 = arith.constant 8.000000e+00 : f32
    %110 = vector.broadcast %cst_26 : f32 to vector<16x16xf32>
    %111 = arith.cmpf oeq, %9, %110 : vector<16x16xf32>
    %c8_i32 = arith.constant 8 : i32
    %112 = arith.addi %0, %c8_i32 : i32
    %113 = arith.index_cast %112 : i32 to index
    %114 = memref.load %arg4[%113] : memref<60xf32, #tpu.memory_space<smem>>
    %115 = vector.broadcast %114 : f32 to vector<16x16xf32>
    %116 = arith.select %111, %115, %103 : vector<16x16xi1>, vector<16x16xf32>
    %c8_i32_27 = arith.constant 8 : i32
    %117 = arith.addi %0, %c8_i32_27 : i32
    %c1_i32_28 = arith.constant 1 : i32
    %118 = arith.addi %117, %c1_i32_28 : i32
    %119 = arith.index_cast %118 : i32 to index
    %120 = memref.load %arg4[%119] : memref<60xf32, #tpu.memory_space<smem>>
    %121 = vector.broadcast %120 : f32 to vector<16x16xf32>
    %122 = arith.select %111, %121, %109 : vector<16x16xi1>, vector<16x16xf32>
    %123 = math.absf %10 : vector<16x16xf32>
    %cst_29 = arith.constant 1.000000e+00 : f32
    %124 = vector.broadcast %cst_29 : f32 to vector<16x16xf32>
    %125 = arith.subf %124, %123 : vector<16x16xf32>
    %cst_30 = arith.constant 0.000000e+00 : f32
    %126 = vector.broadcast %cst_30 : f32 to vector<16x16xf32>
    %127 = arith.maximumf %125, %126 : vector<16x16xf32>
    %cst_31 = arith.constant 1.000000e+00 : f32
    %128 = vector.broadcast %cst_31 : f32 to vector<16x16xf32>
    %129 = arith.subf %10, %128 : vector<16x16xf32>
    %130 = math.absf %129 : vector<16x16xf32>
    %cst_32 = arith.constant 1.000000e+00 : f32
    %131 = vector.broadcast %cst_32 : f32 to vector<16x16xf32>
    %132 = arith.subf %131, %130 : vector<16x16xf32>
    %cst_33 = arith.constant 0.000000e+00 : f32
    %133 = vector.broadcast %cst_33 : f32 to vector<16x16xf32>
    %134 = arith.maximumf %132, %133 : vector<16x16xf32>
    %135 = arith.mulf %127, %116 : vector<16x16xf32>
    %136 = arith.addf %2, %135 : vector<16x16xf32>
    %137 = arith.mulf %134, %122 : vector<16x16xf32>
    %138 = arith.addf %136, %137 : vector<16x16xf32>
    %c0_34 = arith.constant 0 : index
    %c0_35 = arith.constant 0 : index
    %c0_36 = arith.constant 0 : index
    %139 = vector.load %arg5[%c0_34, %c0_35, %c0_36] : memref<1x16x16xf32, #tpu.memory_space<vmem>>, vector<1x16x16xf32>
    %140 = vector.shape_cast %139 : vector<1x16x16xf32> to vector<16x16xf32>
    %141 = vector.shape_cast %138 : vector<16x16xf32> to vector<1x16x16xf32>
    tpu.vector_store %arg5[%c0_34, %c0_35, %c0_36], %141 {strides = array<i32>} : memref<1x16x16xf32, #tpu.memory_space<vmem>>, vector<1x16x16xf32>,
    return
  }
  func.func @transform_0(%arg0: i32, %arg1: i32, %arg2: i32) -> (i32, i32, i32) {
    %c0_i32 = arith.constant 0 : i32
    return %arg0, %arg1, %arg2 : i32, i32, i32
  }
  func.func @transform_1(%arg0: i32, %arg1: i32, %arg2: i32) -> i32 {
    %c0_i32 = arith.constant 0 : i32
    %c0_i32_0 = arith.constant 0 : i32
    return %c0_i32 : i32
  }
  func.func @transform_2(%arg0: i32, %arg1: i32, %arg2: i32) -> (i32, i32, i32) {
    %c0_i32 = arith.constant 0 : i32
    return %arg0, %arg1, %arg2 : i32, i32, i32
  }
}

</mosaic_0001>

<llo_original>
// kernel: tpu_custom_call.1
$region0: #{tpu_custom_call.1}
  #allocation0 [shape = 'u32[]', space=smem, size = 0x4, offset = 0x4, fixed_abs, tag = 'smem constant byte address 0x4 - core index']
  #allocation1 [shape = 'u32[144,128]{1,0:T(1,128)}', space=vmem, size = 0x12000, scoped, tag = 'internal scratch']
  %s0 = inlined_call_operand.hbm [shape: f32[6,16,16], index: 0, kind: input, shape index: {}, may-alias: {0,2}]
  %s1 = inlined_call_operand.vmem [shape: f32[60], index: 1, kind: input, shape index: {}]
  %s2 = inlined_call_operand.hbm [shape: f32[6,16,16], index: 2, kind: output, shape index: {}, may-alias: {0,2}]
  %s3 = sld [smem:[#allocation0]]
  $region49: #{tpu_custom_call.1} parent=0
    _
  %s5 = ssub.s32 1, %s3
  %s6 = scalar_select 0, %s5, %s3
  $region1: #{tpu_custom_call.1} parent=0
    #allocation2 [shape = 'u8[16384]{0}', space=vmem, size = 0x4000, scoped, tag = 'input window, operand 0']
    #allocation3 [shape = 's32[2]{0}', space=sflag, size = 0x8, scoped, tag = 'scoped memory for tpu_custom_call.1']
    #allocation4 [shape = 's32[2]{0}', space=sflag, size = 0x8, scoped, tag = 'scoped memory for tpu_custom_call.1']
    #allocation5 [shape = 's32[2]{0}', space=sflag, size = 0x8, scoped, tag = 'scoped memory for tpu_custom_call.1']
    #allocation6 [shape = 'u8[512]{0}', space=smem, size = 0x200, scoped, tag = 'input window, operand 1, single buffered']
    #allocation7 [shape = 'u8[16384]{0}', space=vmem, size = 0x4000, scoped, tag = 'output window, operand 0']
    %7 = vsyncpa [#allocation3], 0
    %s8 = scalar_lea.sflag [#allocation3], 1
    %9 = vsyncpa %s8, 0
    %10 = vsyncpa [#allocation5], 0
    %11 = vsyncpa [#allocation4], 0
    %s12 = scalar_lea.sflag [#allocation4], 1
    %13 = vsyncpa %s12, 0
    loop: start=0, step=1, limit=8
    $region2: #{tpu_custom_call.1} parent=1 // loop_pre_header
      _
    $region3: #{tpu_custom_call.1} parent=1 // loop_header
      %s15 = sphi 0, %s19
      %p16 = scmp.ge.s32.totalorder %s15, 8
      %s22 = sphi 0, %s41
      %s23 = sphi 0, %s37
      %s24 = sphi 0, %s33
      %s25 = sphi 0, %s22
      %s26 = sphi 0, %s23
      %s27 = sphi 0, %s24
      %s28 = sphi 0, %s25
      %s29 = sphi 0, %s26
      %s30 = sphi 0, %s27
      %s48 = sphi 0, %s50
      %s51 = sphi 0, %s48
      %s52 = sphi 0, %s51
      %s68 = sphi 0, %s52
      %s72 = sphi 0, %s72
      %s74 = sphi 0, %s72
      %s75 = sphi 0, %s74
      %s89 = sphi 0, %s75
      %s99 = sphi 0, %s101
      %s102 = sphi 0, %s99
      %s103 = sphi 0, %s102
      %s119 = sphi 0, %s103
    $region4: #{tpu_custom_call.1} parent=1 // loop_header_branch
      %18 = sbr.rel (%p16) target = $region8
    $region5: #{tpu_custom_call.1} parent=1 // loop_body
      %s20 = ssub.s32 %s15, 1
      %s21 = ssub.s32 %s15, 2
      %s31 = sadd.s32 1, %s24
      %p32 = scmp.ge.s32.totalorder %s31, 1
      %s33 = scalar_select %p32, 0, %s31
      %s34 = sadd.s32 1, %s23
      %s35 = scalar_select %p32, %s34, %s23
      %p36 = scmp.ge.s32.totalorder %s35, 1
      %s37 = scalar_select %p36, 0, %s35
      %s38 = sadd.s32 1, %s22
      %s39 = scalar_select %p36, %s38, %s22
      %p40 = scmp.ge.s32.totalorder %s39, 6
      %s41 = scalar_select %p40, 0, %s39
      %s42 = ssub.s32 %s22, %s41
      %s43 = ssub.s32 %s23, %s37
      %s44 = sor.u32 %s42, %s43
      %s45 = ssub.s32 %s24, %s33
      %s46 = sor.u32 %s44, %s45
      %p47 = scmp.eq.s32.totalorder %s46, 0
      %s49 = sadd.s32 %s48, 1
      %s50 = scalar_select %p47, %s48, %s49
      %p53 = pneg %p47
      %p54 = scmp.eq.s32.totalorder %s15, 5
      %p55 = por %p53, %p54
      %p56 = scmp.ne.s32.totalorder %s48, %s51
      %p57 = scmp.eq.s32.totalorder %s15, 0
      %p58 = por %p56, %p57
      %p59 = scmp.ne.s32.totalorder %s48, %s51
      %p60 = scmp.eq.s32.totalorder %s20, 5
      %p61 = por %p59, %p60
      %p62 = scmp.ne.s32.totalorder %s51, %s52
      %p63 = scmp.eq.s32.totalorder %s20, 0
      %p64 = por %p62, %p63
      %p65 = scmp.ne.s32.totalorder %s51, %s52
      %p66 = scmp.eq.s32.totalorder %s21, 5
      %p67 = por %p65, %p66
      %p69 = scmp.ne.s32.totalorder %s52, %s68
      %p70 = scmp.eq.s32.totalorder %s21, 0
      %p71 = por %p69, %p70
      %s73 = sadd.s32 %s72, 1
      %p76 = scmp.eq.s32.totalorder %s15, 5
      %p77 = scmp.ne.s32.totalorder %s72, %s74
      %p78 = scmp.eq.s32.totalorder %s15, 0
      %p79 = por %p77, %p78
      %p80 = scmp.ne.s32.totalorder %s72, %s74
      %p81 = scmp.eq.s32.totalorder %s20, 5
      %p82 = por %p80, %p81
      %p83 = scmp.ne.s32.totalorder %s74, %s75
      %p84 = scmp.eq.s32.totalorder %s20, 0
      %p85 = por %p83, %p84
      %p86 = scmp.ne.s32.totalorder %s74, %s75
      %p87 = scmp.eq.s32.totalorder %s21, 5
      %p88 = por %p86, %p87
      %p90 = scmp.ne.s32.totalorder %s75, %s89
      %p91 = scmp.eq.s32.totalorder %s21, 0
      %p92 = por %p90, %p91
      %s93 = ssub.s32 %s22, %s41
      %s94 = ssub.s32 %s23, %s37
      %s95 = sor.u32 %s93, %s94
      %s96 = ssub.s32 %s24, %s33
      %s97 = sor.u32 %s95, %s96
      %p98 = scmp.eq.s32.totalorder %s97, 0
      %s100 = sadd.s32 %s99, 1
      %s101 = scalar_select %p98, %s99, %s100
      %p104 = pneg %p98
      %p105 = scmp.eq.s32.totalorder %s15, 5
      %p106 = por %p104, %p105
      %p107 = scmp.ne.s32.totalorder %s99, %s102
      %p108 = scmp.eq.s32.totalorder %s15, 0
      %p109 = por %p107, %p108
      %p110 = scmp.ne.s32.totalorder %s99, %s102
      %p111 = scmp.eq.s32.totalorder %s20, 5
      %p112 = por %p110, %p111
      %p113 = scmp.ne.s32.totalorder %s102, %s103
      %p114 = scmp.eq.s32.totalorder %s20, 0
      %p115 = por %p113, %p114
      %p116 = scmp.ne.s32.totalorder %s102, %s103
      %p117 = scmp.eq.s32.totalorder %s21, 5
      %p118 = por %p116, %p117
      %p120 = scmp.ne.s32.totalorder %s103, %s119
      %p121 = scmp.eq.s32.totalorder %s21, 0
      %p122 = por %p120, %p121
      %p123 = scmp.le.s32.totalorder 1, %s15
      %p124 = scmp.lt.s32.totalorder %s15, 7
      %p125 = pnand %p123, %p124
      %p126 = pneg %p125
      // Predicated region
      $region9: #{tpu_custom_call.1} parent=5 // pred_check
        _
      $region10: #{tpu_custom_call.1} parent=5 // pred_check_branch
        %128 = sbr.rel (%p125) target = $region12
      $region11: #{tpu_custom_call.1} parent=5 // pred_region
        %s129 = ssub.s32 %s15, 1
        // Predicated region
        $region13: #{tpu_custom_call.1} parent=11 // pred_check
          %p130 = pneg %p85
        $region14: #{tpu_custom_call.1} parent=11 // pred_check_branch
          %132 = sbr.rel (%p130) target = $region16
        $region15: #{tpu_custom_call.1} parent=11 // pred_region
          %s134 = ssub.s32 16, 16
          %135 = vsyncadd [#allocation5], %s134
          %s137 = sshll.u32 %s1, 4
          %s138 = int_to_ptr.vmem [resolvable:$true] %s137
          %140 = dma.vmem_to_smem %s138, 16, [#allocation6], [#allocation5]
        $region16: #{tpu_custom_call.1} parent=11 // pred_fallthru
          _
      $region12: #{tpu_custom_call.1} parent=5 // pred_fallthru
        _
      %p141 = scmp.lt.s32.totalorder %s15, 6
      // Predicated region
      $region17: #{tpu_custom_call.1} parent=5 // pred_check
        %p142 = pneg %p141
      $region18: #{tpu_custom_call.1} parent=5 // pred_check_branch
        %144 = sbr.rel (%p142) target = $region20
      $region19: #{tpu_custom_call.1} parent=5 // pred_region
        // Predicated region
        $region21: #{tpu_custom_call.1} parent=19 // pred_check
          %p145 = pneg %p58
        $region22: #{tpu_custom_call.1} parent=19 // pred_check_branch
          %147 = sbr.rel (%p145) target = $region24
        $region23: #{tpu_custom_call.1} parent=19 // pred_region
          %s148 = sand.u32 %s48, 1
          %s149 = scalar_lea.sflag [#allocation3], %s148
          %s150 = sand.u32 %s48, 1
          %s151 = smul.addr %s150, 16
          %s152 = scalar_lea.vmem [#allocation2], %s151
          %s153 = smul.u32 2, %s23
          %s155 = ssub.s32 256, 256
          %156 = vsyncadd %s149, %s155
          %s157 = sadd.s32 %s24, %s153
          %s158 = smul.addr %s22, 2
          %s159 = sadd.s32 %s157, %s158
          %s160 = smul.addr %s159, 128
          %s161 = scalar_lea.hbm %s0, %s160
          %s162 = sshll.u32 %s152, 4
          %s163 = int_to_ptr.vmem [resolvable:$true] %s162
          %168 = dma.hbm_to_vmem [thread:$0]  %s161, 256, %s163, %s149, 128, 128, 8
        $region24: #{tpu_custom_call.1} parent=19 // pred_fallthru
          _
      $region20: #{tpu_custom_call.1} parent=5 // pred_fallthru
        _
      %p169 = scmp.le.s32.totalorder 1, %s15
      %p170 = scmp.lt.s32.totalorder %s15, 7
      %p171 = pnand %p169, %p170
      %p172 = pneg %p171
      // Predicated region
      $region25: #{tpu_custom_call.1} parent=5 // pred_check
        _
      $region26: #{tpu_custom_call.1} parent=5 // pred_check_branch
        %174 = sbr.rel (%p171) target = $region28
      $region27: #{tpu_custom_call.1} parent=5 // pred_region
        %s175 = ssub.s32 %s15, 1
        %s176 = sand.u32 %s51, 1
        %s177 = scalar_lea.sflag [#allocation3], %s176
        %s178 = sand.u32 %s51, 1
        %s179 = smul.addr %s178, 16
        %s180 = scalar_lea.vmem [#allocation2], %s179
        // Predicated region
        $region29: #{tpu_custom_call.1} parent=27 // pred_check
          %p181 = pneg %p64
        $region30: #{tpu_custom_call.1} parent=27 // pred_check_branch
          %183 = sbr.rel (%p181) target = $region32
        $region31: #{tpu_custom_call.1} parent=27 // pred_region
          %184 = dma.done %s177, 256
        $region32: #{tpu_custom_call.1} parent=27 // pred_fallthru
          _
        // Predicated region
        $region33: #{tpu_custom_call.1} parent=27 // pred_check
          %p185 = pneg %p85
        $region34: #{tpu_custom_call.1} parent=27 // pred_check_branch
          %187 = sbr.rel (%p185) target = $region36
        $region35: #{tpu_custom_call.1} parent=27 // pred_region
          %188 = dma.done [#allocation5], 16
        $region36: #{tpu_custom_call.1} parent=27 // pred_fallthru
          _
        %189 = sfence
        %s190 = sand.u32 %s51, 1
        %s191 = scalar_lea.sflag [#allocation3], %s190
        %s192 = sand.u32 %s51, 1
        %s193 = smul.addr %s192, 16
        %s194 = scalar_lea.vmem [#allocation2], %s193
        %p195 = pneg %p64
        %p196 = pneg %p61
        %p197 = pneg %p85
        %p198 = pneg %p82
        %p199 = pneg %p115
        %p200 = pneg %p112
        %s201 = sand.u32 %s102, 1
        %s202 = scalar_lea.sflag [#allocation4], %s201
        %s203 = sand.u32 %s102, 1
        %s204 = smul.addr %s203, 16
        %s205 = scalar_lea.vmem [#allocation7], %s204
        %s206 = smul.u32 2, %s26
        %s207 = smul.u32 2, %s26
        %s208 = smul.u32 %s25, 10
        %v209 = vld [vmem:[%s180] sm:$0xff]
        %v210 = vld [vmem:[%s180 + $0x8] sm:$0xff]
        %v211 = vmul.f32 %v209, 9.0
        %v212 = vmul.f32 %v210, 9.0
        %v213 = vfloor.f32 %v211
        %v214 = vfloor.f32 %v212
        %v215 = vmax.f32 %v213, 0.0
        %v216 = vmax.f32 %v214, 0.0
        %v217 = vmin.f32 %v215, 8.0
        %v218 = vmin.f32 %v216, 8.0
        %v219 = vsub.f32 %v211, %v217
        %v220 = vsub.f32 %v212, %v218
        %s221 = sld [smem:[#allocation6 + %s208]]
        %s222 = sadd.s32 %s208, 1
        %s223 = sld [smem:[#allocation6 + %s222]]
        %vm224 = vcmp.eq.f32.partialorder %v217, 1.0
        %vm225 = vcmp.eq.f32.partialorder %v218, 1.0
        %v226 = vstv %s223
        %v227 = vstv %s221
        %v228 = vsel %vm224, %v226, %v227
        %v229 = vsel %vm225, %v226, %v227
        %s230 = sadd.s32 %s208, 2
        %s231 = sld [smem:[#allocation6 + %s230]]
        %v232 = vstv %s231
        %v233 = vsel %vm224, %v232, %v226
        %v234 = vsel %vm225, %v232, %v226
        %vm235 = vcmp.eq.f32.partialorder %v217, 2.0
        %vm236 = vcmp.eq.f32.partialorder %v218, 2.0
        %v237 = vsel %vm235, %v232, %v228
        %v238 = vsel %vm236, %v232, %v229
        %s239 = sadd.s32 %s208, 3
        %s240 = sld [smem:[#allocation6 + %s239]]
        %v241 = vstv %s240
        %v242 = vsel %vm235, %v241, %v233
        %v243 = vsel %vm236, %v241, %v234
        %vm244 = vcmp.eq.f32.partialorder %v217, 3.0
        %vm245 = vcmp.eq.f32.partialorder %v218, 3.0
        %v246 = vsel %vm244, %v241, %v237
        %v247 = vsel %vm245, %v241, %v238
        %s248 = sadd.s32 %s208, 4
        %s249 = sld [smem:[#allocation6 + %s248]]
        %v250 = vstv %s249
        %v251 = vsel %vm244, %v250, %v242
        %v252 = vsel %vm245, %v250, %v243
        %vm253 = vcmp.eq.f32.partialorder %v217, 4.0
        %vm254 = vcmp.eq.f32.partialorder %v218, 4.0
        %v255 = vsel %vm253, %v250, %v246
        %v256 = vsel %vm254, %v250, %v247
        %s257 = sadd.s32 %s208, 5
        %s258 = sld [smem:[#allocation6 + %s257]]
        %v259 = vstv %s258
        %v260 = vsel %vm253, %v259, %v251
        %v261 = vsel %vm254, %v259, %v252
        %vm262 = vcmp.eq.f32.partialorder %v217, 5.0
        %vm263 = vcmp.eq.f32.partialorder %v218, 5.0
        %v264 = vsel %vm262, %v259, %v255
        %v265 = vsel %vm263, %v259, %v256
        %s266 = sadd.s32 %s208, 6
        %s267 = sld [smem:[#allocation6 + %s266]]
        %v268 = vstv %s267
        %v269 = vsel %vm262, %v268, %v260
        %v270 = vsel %vm263, %v268, %v261
        %vm271 = vcmp.eq.f32.partialorder %v217, 6.0
        %vm272 = vcmp.eq.f32.partialorder %v218, 6.0
        %v273 = vsel %vm271, %v268, %v264
        %v274 = vsel %vm272, %v268, %v265
        %s275 = sadd.s32 %s208, 7
        %s276 = sld [smem:[#allocation6 + %s275]]
        %v277 = vstv %s276
        %v278 = vsel %vm271, %v277, %v269
        %v279 = vsel %vm272, %v277, %v270
        %vm280 = vcmp.eq.f32.partialorder %v217, 7.0
        %vm281 = vcmp.eq.f32.partialorder %v218, 7.0
        %v282 = vsel %vm280, %v277, %v273
        %v283 = vsel %vm281, %v277, %v274
        %s284 = sadd.s32 %s208, 8
        %s285 = sld [smem:[#allocation6 + %s284]]
        %v286 = vstv %s285
        %v287 = vsel %vm280, %v286, %v278
        %v288 = vsel %vm281, %v286, %v279
        %vm289 = vcmp.eq.f32.partialorder %v217, 8.0
        %vm290 = vcmp.eq.f32.partialorder %v218, 8.0
        %v291 = vsel %vm289, %v286, %v282
        %v292 = vsel %vm290, %v286, %v283
        %s293 = sadd.s32 %s208, 9
        %s294 = sld [smem:[#allocation6 + %s293]]
        %v295 = vstv %s294
        %v296 = vsel %vm289, %v295, %v287
        %v297 = vsel %vm290, %v295, %v288
        %v298 = vand.u32 2147483647, %v219
        %v299 = vand.u32 2147483647, %v220
        %v300 = vsub.f32 1.0, %v298
        %v301 = vsub.f32 1.0, %v299
        %v302 = vmax.f32 %v300, 0.0
        %v303 = vmax.f32 %v301, 0.0
        %v304 = vsub.f32 %v219, 1.0
        %v305 = vsub.f32 %v220, 1.0
        %v306 = vand.u32 2147483647, %v304
        %v307 = vand.u32 2147483647, %v305
        %v308 = vsub.f32 1.0, %v306
        %v309 = vsub.f32 1.0, %v307
        %v310 = vmax.f32 %v308, 0.0
        %v311 = vmax.f32 %v309, 0.0
        %v312 = vmul.f32 %v302, %v291
        %v313 = vmul.f32 %v303, %v292
        %v314 = vadd.f32 %v209, %v312
        %v315 = vadd.f32 %v210, %v313
        %v316 = vmul.f32 %v310, %v296
        %v317 = vmul.f32 %v311, %v297
        %v318 = vadd.f32 %v314, %v316
        %v319 = vadd.f32 %v315, %v317
        %vm320 = vcmask 130048
        %321 = vst.msk [vmem:[%s205] sm:$0xff] %vm320, %v318
        %322 = vst.msk [vmem:[%s205 + $0x8] sm:$0xff] %vm320, %v319
        %s323 = sand.u32 %s102, 1
        %s324 = scalar_lea.sflag [#allocation4], %s323
        %s325 = sand.u32 %s102, 1
        %s326 = smul.addr %s325, 16
        %s327 = scalar_lea.vmem [#allocation7], %s326
        // Predicated region
        $region37: #{tpu_custom_call.1} parent=27 // pred_check
          %p328 = pneg %p112
        $region38: #{tpu_custom_call.1} parent=27 // pred_check_branch
          %330 = sbr.rel (%p328) target = $region40
        $region39: #{tpu_custom_call.1} parent=27 // pred_region
          %s331 = smul.u32 2, %s26
          %s333 = ssub.s32 256, 256
          %334 = vsyncadd %s324, %s333
          %s335 = sadd.s32 %s27, %s331
          %s336 = smul.addr %s25, 2
          %s337 = sadd.s32 %s335, %s336
          %s338 = smul.addr %s337, 128
          %s339 = scalar_lea.hbm %s2, %s338
          %s340 = sshll.u32 %s327, 4
          %s341 = int_to_ptr.vmem [resolvable:$true] %s340
          %346 = dma.vmem_to_hbm [thread:$0]  %s341, 256, %s339, %s324, 128, 128, 8
        $region40: #{tpu_custom_call.1} parent=27 // pred_fallthru
          _
      $region28: #{tpu_custom_call.1} parent=5 // pred_fallthru
        _
      %p347 = scmp.le.s32.totalorder 2, %s15
      // Predicated region
      $region41: #{tpu_custom_call.1} parent=5 // pred_check
        %p348 = pneg %p347
      $region42: #{tpu_custom_call.1} parent=5 // pred_check_branch
        %350 = sbr.rel (%p348) target = $region44
      $region43: #{tpu_custom_call.1} parent=5 // pred_region
        %s351 = ssub.s32 %s15, 2
        // Predicated region
        $region45: #{tpu_custom_call.1} parent=43 // pred_check
          %p352 = pneg %p118
        $region46: #{tpu_custom_call.1} parent=43 // pred_check_branch
          %354 = sbr.rel (%p352) target = $region48
        $region47: #{tpu_custom_call.1} parent=43 // pred_region
          %s355 = sand.u32 %s103, 1
          %s356 = scalar_lea.sflag [#allocation4], %s355
          %s357 = sand.u32 %s103, 1
          %s358 = smul.addr %s357, 16
          %s359 = scalar_lea.vmem [#allocation7], %s358
          %360 = dma.done %s356, 256
        $region48: #{tpu_custom_call.1} parent=43 // pred_fallthru
          _
      $region44: #{tpu_custom_call.1} parent=5 // pred_fallthru
        _
    $region6: #{tpu_custom_call.1} parent=1 // loop_footer
      %s19 = sadd.s32 1, %s15
    $region7: #{tpu_custom_call.1} parent=1 // loop_footer_branch
      %14 = sbr.rel target = $region3
    $region8: #{tpu_custom_call.1} parent=1 // loop_exit
      _
    %361 = vsyncpa [#allocation3], 1
    %s362 = scalar_lea.sflag [#allocation3], 1
    %363 = vsyncpa %s362, 1
    %364 = vsyncpa [#allocation4], 1
    %s365 = scalar_lea.sflag [#allocation4], 1
    %366 = vsyncpa %s365, 1
    %367 = vsyncpa [#allocation5], 1
    %s368 = scalar_lea.sflag [#allocation5], 1
    %369 = vsyncpa %s368, 1

</llo_original>
